<compile_context>
chip_gen: v6e
topology: v6e:2x2x1
jax: 0.10.0
libtpu: 0.0.40
codegen_flags: <defaults>
</compile_context>

<pallas_src>
import functools

import jax
import jax.numpy as jnp
from jax.experimental import pallas as pl
from jax.experimental.pallas import tpu as pltpu


BN_EPS = 1e-5  # nn.BatchNorm1d default


def _basic_block_kernel(x_ref, w_ref, b_ref, g_ref, be_ref, o_ref,
                        sum_sc, sumsq_sc, *, K, L_out, M_total):
    """Fused Conv1d + bias + BatchNorm1d(train) + ReLU, NCL layout.

    grid = (pass, batch):
      pass 0: conv+bias for batch tile n, accumulate per-channel sum / sumsq.
      pass 1: recompute conv+bias, apply folded BN scale/shift + ReLU, store.

    x_ref     : (1, Cin, L)      f32/bf16   one batch element (full L)
    w_ref     : (K, Cout, Cin)   f32/bf16   conv weight, tap-major (resident)
    b_ref     : (Cout, 1)        f32        conv bias
    g_ref     : (Cout, 1)        f32        BN weight (gamma)
    be_ref    : (Cout, 1)        f32        BN bias (beta)
    o_ref     : (1, Cout, L_out) f32        output tile (NCL)
    sum_sc    : (Cout, 1)        f32        persistent per-channel sum
    sumsq_sc  : (Cout, 1)        f32        persistent per-channel sum of squares
    """
    p = pl.program_id(0)   # 0 = stats pass, 1 = normalize pass
    n = pl.program_id(1)   # batch tile index

    def conv_bias():
        # In-kernel im2col: y[co, l] = sum_k W_k[co, :] @ x[:, l + k]  + b[co]
        # K is small and static -> unrolled Python loop of K tiny MXU dots,
        # f32 accumulation.  L_out streams through the MXU's lane dimension.
        acc = jnp.dot(w_ref[0], x_ref[0, :, 0:L_out],
                      preferred_element_type=jnp.float32)
        for k in range(1, K):
            acc = acc + jnp.dot(w_ref[k], x_ref[0, :, k:k + L_out],
                                preferred_element_type=jnp.float32)
        return acc + b_ref[...]                      # (Cout, L_out), f32

    @pl.when(p == 0)
    def _stats_pass():
        @pl.when(n == 0)
        def _init():
            sum_sc[...] = jnp.zeros_like(sum_sc)
            sumsq_sc[...] = jnp.zeros_like(sumsq_sc)

        y = conv_bias()
        sum_sc[...] += jnp.sum(y, axis=1, keepdims=True)
        sumsq_sc[...] += jnp.sum(y * y, axis=1, keepdims=True)
        # o_ref is intentionally not written: its block index stays constant
        # over this pass, so nothing is flushed to HBM here.

    @pl.when(p == 1)
    def _normalize_pass():
        y = conv_bias()                              # cheap recompute (mem-bound)
        inv_m = 1.0 / float(M_total)
        mean = sum_sc[...] * inv_m                   # (Cout, 1)
        var = sumsq_sc[...] * inv_m - mean * mean    # biased variance (BN train)
        scale = g_ref[...] * jax.lax.rsqrt(var + BN_EPS)
        shift = be_ref[...] - mean * scale
        # Folded BN + ReLU: 2 full-tile VPU ops, f32 elementwise (v5e-safe).
        o_ref[0, :, :] = jnp.maximum(y * scale + shift, 0.0)


@functools.partial(jax.jit, static_argnames=("kernel_size", "use_bf16_matmul"))
def basic_block_forward(x, w, b, gamma, beta, *, kernel_size,
                        use_bf16_matmul=False):
    """x: (N, Cin, L) NCL.  Returns (N, Cout, L_out) NCL, L_out = L - K + 1."""
    N, Cin, L = x.shape
    Cout = w.shape[0]
    K = kernel_size
    L_out = L - K + 1
    M = N * L_out

    # bf16 inputs for the MXU (f32 accumulation) halve x-stream bytes on
    # v6e/v7x; all BN/ReLU elementwise math stays f32 (required on v5e).
    mm_dtype = jnp.bfloat16 if use_bf16_matmul else jnp.float32
    x_mm = x.astype(mm_dtype)
    w_kcc = jnp.transpose(w, (2, 0, 1)).astype(mm_dtype)   # (K, Cout, Cin)

    kernel = functools.partial(_basic_block_kernel, K=K, L_out=L_out, M_total=M)

    # Conv is computed in both passes; BN/ReLU flops are negligible.
    flops = 2 * (2 * M * Cin * K * Cout)
    bytes_accessed = (2 * N * Cin * L * x_mm.dtype.itemsize      # x read twice
                      + K * Cout * Cin * w_kcc.dtype.itemsize    # weights
                      + N * Cout * L_out * 4                     # output write
                      + 3 * Cout * 4)                            # bias/gamma/beta

    out = pl.pallas_call(
        kernel,
        out_shape=jax.ShapeDtypeStruct((N, Cout, L_out), jnp.float32),
        grid_spec=pltpu.PrefetchScalarGridSpec(
            num_scalar_prefetch=0,
            grid=(2, N),                                   # (pass, batch tile)
            in_specs=[
                # One batch element per step, full L (halo-free in-kernel
                # im2col).  TODO(synk): for very long L, add an L-tile axis
                # with halo windows via memory_space=pl.ANY + make_async_copy.
                pl.BlockSpec((1, Cin, L), lambda p, n: (n, 0, 0)),
                # Small parameters: constant block index -> stay VMEM-resident.
                pl.BlockSpec((K, Cout, Cin), lambda p, n: (0, 0, 0)),
                pl.BlockSpec((Cout, 1), lambda p, n: (0, 0)),
                pl.BlockSpec((Cout, 1), lambda p, n: (0, 0)),
                pl.BlockSpec((Cout, 1), lambda p, n: (0, 0)),
            ],
            # Output emitted directly in NCL (L_out on lanes).  Block index
            # n*p == 0 for the whole stats pass => no writeback during pass 0,
            # exactly one HBM writeback per output tile in pass 1.
            out_specs=pl.BlockSpec((1, Cout, L_out), lambda p, n: (n * p, 0, 0)),
            scratch_shapes=[
                pltpu.VMEM((Cout, 1), jnp.float32),   # per-channel sum
                pltpu.VMEM((Cout, 1), jnp.float32),   # per-channel sum of squares
            ],
        ),
        compiler_params=pltpu.CompilerParams(
            # Both axes "arbitrary": the pass axis carries the scratch
            # dependency and the batch axis carries the BN-stats reduction, so
            # it cannot be megacore-sharded in this single fused call.
            dimension_semantics=("arbitrary", "arbitrary"),
            vmem_limit_bytes=48 * 1024 * 1024,        # fits v7x's 64 MiB VMEM
        ),
        cost_estimate=pl.CostEstimate(
            flops=flops, transcendentals=0, bytes_accessed=bytes_accessed),
    )(
        x_mm,
        w_kcc,
        b.reshape(Cout, 1).astype(jnp.float32),
        gamma.reshape(Cout, 1).astype(jnp.float32),
        beta.reshape(Cout, 1).astype(jnp.float32),
    )
    # TODO(synk): BatchNorm1d running_mean/running_var buffer updates (module
    # training-state side effect) are not emitted; only the forward output is.
    return out


def _reference_forward(x, w, b, gamma, beta, kernel_size):
    """Pure-JAX reference (conv1d + BN(train) + ReLU) for a sanity check."""
    Cout = w.shape[0]
    y = jax.lax.conv_general_dilated(
        x, w, window_strides=(1,), padding="VALID",
        dimension_numbers=("NCH", "OIH", "NCH"))
    y = y + b.reshape(1, Cout, 1)
    mean = jnp.mean(y, axis=(0, 2), keepdims=True)
    var = jnp.mean((y - mean) ** 2, axis=(0, 2), keepdims=True)
    y = (y - mean) * jax.lax.rsqrt(var + BN_EPS)
    y = y * gamma.reshape(1, Cout, 1) + beta.reshape(1, Cout, 1)
    return jnp.maximum(y, 0.0)


if __name__ == "__main__":
    # Small shapes consistent with BasicBlock(in_channels=4, out_channels=8,
    # conv=nn.Conv1d, kernel_size=3) applied to x of shape (2, 4, 16).
    N, Cin, Cout, L, K = 2, 4, 8, 16, 3

    key = jax.random.PRNGKey(0)
    kx, kw, kb, kg, kbe = jax.random.split(key, 5)

    x = jax.random.normal(kx, (N, Cin, L), dtype=jnp.float32)
    w = jax.random.normal(kw, (Cout, Cin, K), dtype=jnp.float32) * 0.1     # conv weight
    b = jax.random.normal(kb, (Cout,), dtype=jnp.float32) * 0.1            # conv bias
    gamma = 1.0 + 0.1 * jax.random.normal(kg, (Cout,), dtype=jnp.float32)  # BN weight
    beta = 0.1 * jax.random.normal(kbe, (Cout,), dtype=jnp.float32)        # BN bias

    ref = _reference_forward(x, w, b, gamma, beta, K)

    # f32 path: exact check.
    out = basic_block_forward(x, w, b, gamma, beta, kernel_size=K,
                              use_bf16_matmul=False)
    out = jax.block_until_ready(out)
    assert out.shape == (N, Cout, L - K + 1), out.shape
    assert jnp.allclose(out, ref, atol=1e-4, rtol=1e-4), "f32 mismatch vs reference"

    # bf16-matmul path (v6e/v7x perf knob): loose check, f32 accumulation/BN.
    out_bf16 = basic_block_forward(x, w, b, gamma, beta, kernel_size=K,
                                   use_bf16_matmul=True)
    out_bf16 = jax.block_until_ready(out_bf16)
    assert jnp.allclose(out_bf16, ref, atol=5e-2, rtol=5e-2), "bf16 mismatch vs reference"

    print("KERNEL_OK")
</pallas_src>

<mosaic_0001>
module attributes {stable_mosaic.version = 11 : i64} {
  func.func @_basic_block_kernel(%arg0: i32, %arg1: i32, %arg2: memref<1x4x16xf32, #tpu.memory_space<vmem>>, %arg3: memref<3x8x4xf32, #tpu.memory_space<vmem>>, %arg4: memref<8x1xf32, #tpu.memory_space<vmem>>, %arg5: memref<8x1xf32, #tpu.memory_space<vmem>>, %arg6: memref<8x1xf32, #tpu.memory_space<vmem>>, %arg7: memref<1x8x14xf32, #tpu.memory_space<vmem>>, %arg8: memref<8x1xf32, #tpu.memory_space<vmem>>, %arg9: memref<8x1xf32, #tpu.memory_space<vmem>>) attributes {dimension_semantics = [#tpu.dimension_semantics<arbitrary>, #tpu.dimension_semantics<arbitrary>], iteration_bounds = array<i64: 2, 2>, scalar_prefetch = 0 : i64, scratch_operands = 2 : i64, tpu.core_type = #tpu.core_type<tc>, window_params = [{transform_indices = @transform_0, window_bounds = array<i64: 1, 4, 16>}, {pipeline_mode = #tpu.pipeline_mode<synchronous>, transform_indices = @transform_1, window_bounds = array<i64: 3, 8, 4>}, {pipeline_mode = #tpu.pipeline_mode<synchronous>, transform_indices = @transform_2, window_bounds = array<i64: 8, 1>}, {pipeline_mode = #tpu.pipeline_mode<synchronous>, transform_indices = @transform_3, window_bounds = array<i64: 8, 1>}, {pipeline_mode = #tpu.pipeline_mode<synchronous>, transform_indices = @transform_4, window_bounds = array<i64: 8, 1>}, {transform_indices = @transform_5, window_bounds = array<i64: 1, 8, 14>}]} {
    %c0_i32 = arith.constant 0 : i32
    %0 = arith.cmpi eq, %arg0, %c0_i32 : i32
    %1 = arith.extui %0 : i1 to i32
    %c0_i32_0 = arith.constant 0 : i32
    %2 = arith.cmpi ne, %1, %c0_i32_0 : i32
    scf.if %2 {
      %c0_i32_2 = arith.constant 0 : i32
      %6 = arith.cmpi eq, %arg1, %c0_i32_2 : i32
      %7 = arith.extui %6 : i1 to i32
      %c0_i32_3 = arith.constant 0 : i32
      %8 = arith.cmpi ne, %7, %c0_i32_3 : i32
      scf.if %8 {
        %cst_33 = arith.constant 0.000000e+00 : f32
        %40 = vector.broadcast %cst_33 : f32 to vector<8x1xf32>
        %c0_34 = arith.constant 0 : index
        %c0_35 = arith.constant 0 : index
        %41 = vector.load %arg8[%c0_34, %c0_35] : memref<8x1xf32, #tpu.memory_space<vmem>>, vector<8x1xf32>
        tpu.vector_store %arg8[%c0_34, %c0_35], %40 {strides = array<i32>} : memref<8x1xf32, #tpu.memory_space<vmem>>, vector<8x1xf32>,
        %cst_36 = arith.constant 0.000000e+00 : f32
        %42 = vector.broadcast %cst_36 : f32 to vector<8x1xf32>
        %c0_37 = arith.constant 0 : index
        %c0_38 = arith.constant 0 : index
        %43 = vector.load %arg9[%c0_37, %c0_38] : memref<8x1xf32, #tpu.memory_space<vmem>>, vector<8x1xf32>
        tpu.vector_store %arg9[%c0_37, %c0_38], %42 {strides = array<i32>} : memref<8x1xf32, #tpu.memory_space<vmem>>, vector<8x1xf32>,
      } else {
      }
      %c0 = arith.constant 0 : index
      %c0_4 = arith.constant 0 : index
      %c0_5 = arith.constant 0 : index
      %9 = vector.load %arg3[%c0, %c0_4, %c0_5] : memref<3x8x4xf32, #tpu.memory_space<vmem>>, vector<1x8x4xf32>
      %10 = vector.shape_cast %9 : vector<1x8x4xf32> to vector<8x4xf32>
      %c0_6 = arith.constant 0 : index
      %c0_7 = arith.constant 0 : index
      %c0_8 = arith.constant 0 : index
      %11 = vector.load %arg2[%c0_6, %c0_7, %c0_8] : memref<1x4x16xf32, #tpu.memory_space<vmem>>, vector<1x4x14xf32>
      %12 = vector.shape_cast %11 : vector<1x4x14xf32> to vector<4x14xf32>
      %cst = arith.constant dense<0.000000e+00> : vector<8x14xf32>
      %13 = tpu.matmul %10, %12, %cst {dimension_numbers = #tpu.dot_dimension_numbers<[1], [0], [0], [1], [0, 0, 1, 1], [], []>} : vector<8x4xf32>, vector<4x14xf32>, vector<8x14xf32> -> vector<8x14xf32>
      %c1 = arith.constant 1 : index
      %c0_9 = arith.constant 0 : index
      %c0_10 = arith.constant 0 : index
      %14 = vector.load %arg3[%c1, %c0_9, %c0_10] : memref<3x8x4xf32, #tpu.memory_space<vmem>>, vector<1x8x4xf32>
      %15 = vector.shape_cast %14 : vector<1x8x4xf32> to vector<8x4xf32>
      %c0_11 = arith.constant 0 : index
      %c0_12 = arith.constant 0 : index
      %c1_13 = arith.constant 1 : index
      %16 = vector.load %arg2[%c0_11, %c0_12, %c1_13] : memref<1x4x16xf32, #tpu.memory_space<vmem>>, vector<1x4x14xf32>
      %17 = vector.shape_cast %16 : vector<1x4x14xf32> to vector<4x14xf32>
      %cst_14 = arith.constant dense<0.000000e+00> : vector<8x14xf32>
      %18 = tpu.matmul %15, %17, %cst_14 {dimension_numbers = #tpu.dot_dimension_numbers<[1], [0], [0], [1], [0, 0, 1, 1], [], []>} : vector<8x4xf32>, vector<4x14xf32>, vector<8x14xf32> -> vector<8x14xf32>
      %19 = arith.addf %13, %18 : vector<8x14xf32>
      %c2 = arith.constant 2 : index
      %c0_15 = arith.constant 0 : index
      %c0_16 = arith.constant 0 : index
      %20 = vector.load %arg3[%c2, %c0_15, %c0_16] : memref<3x8x4xf32, #tpu.memory_space<vmem>>, vector<1x8x4xf32>
      %21 = vector.shape_cast %20 : vector<1x8x4xf32> to vector<8x4xf32>
      %c0_17 = arith.constant 0 : index
      %c0_18 = arith.constant 0 : index
      %c2_19 = arith.constant 2 : index
      %22 = vector.load %arg2[%c0_17, %c0_18, %c2_19] : memref<1x4x16xf32, #tpu.memory_space<vmem>>, vector<1x4x14xf32>
      %23 = vector.shape_cast %22 : vector<1x4x14xf32> to vector<4x14xf32>
      %cst_20 = arith.constant dense<0.000000e+00> : vector<8x14xf32>
      %24 = tpu.matmul %21, %23, %cst_20 {dimension_numbers = #tpu.dot_dimension_numbers<[1], [0], [0], [1], [0, 0, 1, 1], [], []>} : vector<8x4xf32>, vector<4x14xf32>, vector<8x14xf32> -> vector<8x14xf32>
      %25 = arith.addf %19, %24 : vector<8x14xf32>
      %c0_21 = arith.constant 0 : index
      %c0_22 = arith.constant 0 : index
      %26 = vector.load %arg4[%c0_21, %c0_22] : memref<8x1xf32, #tpu.memory_space<vmem>>, vector<8x1xf32>
      %27 = vector.broadcast %26 : vector<8x1xf32> to vector<8x14xf32>
      %28 = arith.addf %25, %27 : vector<8x14xf32>
      %c0_23 = arith.constant 0 : index
      %c0_24 = arith.constant 0 : index
      %29 = vector.load %arg8[%c0_23, %c0_24] : memref<8x1xf32, #tpu.memory_space<vmem>>, vector<8x1xf32>
      %cst_25 = arith.constant dense<0.000000e+00> : vector<8xf32>
      %30 = vector.multi_reduction <add>, %28, %cst_25 [1] : vector<8x14xf32> to vector<8xf32>
      %31 = vector.shape_cast %30 : vector<8xf32> to vector<8x1xf32>
      %32 = arith.addf %29, %31 : vector<8x1xf32>
      %c0_26 = arith.constant 0 : index
      %c0_27 = arith.constant 0 : index
      %33 = vector.load %arg8[%c0_26, %c0_27] : memref<8x1xf32, #tpu.memory_space<vmem>>, vector<8x1xf32>
      tpu.vector_store %arg8[%c0_26, %c0_27], %32 {strides = array<i32>} : memref<8x1xf32, #tpu.memory_space<vmem>>, vector<8x1xf32>,
      %c0_28 = arith.constant 0 : index
      %c0_29 = arith.constant 0 : index
      %34 = vector.load %arg9[%c0_28, %c0_29] : memref<8x1xf32, #tpu.memory_space<vmem>>, vector<8x1xf32>
      %35 = arith.mulf %28, %28 : vector<8x14xf32>
      %cst_30 = arith.constant dense<0.000000e+00> : vector<8xf32>
      %36 = vector.multi_reduction <add>, %35, %cst_30 [1] : vector<8x14xf32> to vector<8xf32>
      %37 = vector.shape_cast %36 : vector<8xf32> to vector<8x1xf32>
      %38 = arith.addf %34, %37 : vector<8x1xf32>
      %c0_31 = arith.constant 0 : index
      %c0_32 = arith.constant 0 : index
      %39 = vector.load %arg9[%c0_31, %c0_32] : memref<8x1xf32, #tpu.memory_space<vmem>>, vector<8x1xf32>
      tpu.vector_store %arg9[%c0_31, %c0_32], %38 {strides = array<i32>} : memref<8x1xf32, #tpu.memory_space<vmem>>, vector<8x1xf32>,
    } else {
    }
    %c1_i32 = arith.constant 1 : i32
    %3 = arith.cmpi eq, %arg0, %c1_i32 : i32
    %4 = arith.extui %3 : i1 to i32
    %c0_i32_1 = arith.constant 0 : i32
    %5 = arith.cmpi ne, %4, %c0_i32_1 : i32
    scf.if %5 {
      %c0 = arith.constant 0 : index
      %c0_2 = arith.constant 0 : index
      %c0_3 = arith.constant 0 : index
      %6 = vector.load %arg3[%c0, %c0_2, %c0_3] : memref<3x8x4xf32, #tpu.memory_space<vmem>>, vector<1x8x4xf32>
      %7 = vector.shape_cast %6 : vector<1x8x4xf32> to vector<8x4xf32>
      %c0_4 = arith.constant 0 : index
      %c0_5 = arith.constant 0 : index
      %c0_6 = arith.constant 0 : index
      %8 = vector.load %arg2[%c0_4, %c0_5, %c0_6] : memref<1x4x16xf32, #tpu.memory_space<vmem>>, vector<1x4x14xf32>
      %9 = vector.shape_cast %8 : vector<1x4x14xf32> to vector<4x14xf32>
      %cst = arith.constant dense<0.000000e+00> : vector<8x14xf32>
      %10 = tpu.matmul %7, %9, %cst {dimension_numbers = #tpu.dot_dimension_numbers<[1], [0], [0], [1], [0, 0, 1, 1], [], []>} : vector<8x4xf32>, vector<4x14xf32>, vector<8x14xf32> -> vector<8x14xf32>
      %c1 = arith.constant 1 : index
      %c0_7 = arith.constant 0 : index
      %c0_8 = arith.constant 0 : index
      %11 = vector.load %arg3[%c1, %c0_7, %c0_8] : memref<3x8x4xf32, #tpu.memory_space<vmem>>, vector<1x8x4xf32>
      %12 = vector.shape_cast %11 : vector<1x8x4xf32> to vector<8x4xf32>
      %c0_9 = arith.constant 0 : index
      %c0_10 = arith.constant 0 : index
      %c1_11 = arith.constant 1 : index
      %13 = vector.load %arg2[%c0_9, %c0_10, %c1_11] : memref<1x4x16xf32, #tpu.memory_space<vmem>>, vector<1x4x14xf32>
      %14 = vector.shape_cast %13 : vector<1x4x14xf32> to vector<4x14xf32>
      %cst_12 = arith.constant dense<0.000000e+00> : vector<8x14xf32>
      %15 = tpu.matmul %12, %14, %cst_12 {dimension_numbers = #tpu.dot_dimension_numbers<[1], [0], [0], [1], [0, 0, 1, 1], [], []>} : vector<8x4xf32>, vector<4x14xf32>, vector<8x14xf32> -> vector<8x14xf32>
      %16 = arith.addf %10, %15 : vector<8x14xf32>
      %c2 = arith.constant 2 : index
      %c0_13 = arith.constant 0 : index
      %c0_14 = arith.constant 0 : index
      %17 = vector.load %arg3[%c2, %c0_13, %c0_14] : memref<3x8x4xf32, #tpu.memory_space<vmem>>, vector<1x8x4xf32>
      %18 = vector.shape_cast %17 : vector<1x8x4xf32> to vector<8x4xf32>
      %c0_15 = arith.constant 0 : index
      %c0_16 = arith.constant 0 : index
      %c2_17 = arith.constant 2 : index
      %19 = vector.load %arg2[%c0_15, %c0_16, %c2_17] : memref<1x4x16xf32, #tpu.memory_space<vmem>>, vector<1x4x14xf32>
      %20 = vector.shape_cast %19 : vector<1x4x14xf32> to vector<4x14xf32>
      %cst_18 = arith.constant dense<0.000000e+00> : vector<8x14xf32>
      %21 = tpu.matmul %18, %20, %cst_18 {dimension_numbers = #tpu.dot_dimension_numbers<[1], [0], [0], [1], [0, 0, 1, 1], [], []>} : vector<8x4xf32>, vector<4x14xf32>, vector<8x14xf32> -> vector<8x14xf32>
      %22 = arith.addf %16, %21 : vector<8x14xf32>
      %c0_19 = arith.constant 0 : index
      %c0_20 = arith.constant 0 : index
      %23 = vector.load %arg4[%c0_19, %c0_20] : memref<8x1xf32, #tpu.memory_space<vmem>>, vector<8x1xf32>
      %24 = vector.broadcast %23 : vector<8x1xf32> to vector<8x14xf32>
      %25 = arith.addf %22, %24 : vector<8x14xf32>
      %c0_21 = arith.constant 0 : index
      %c0_22 = arith.constant 0 : index
      %26 = vector.load %arg8[%c0_21, %c0_22] : memref<8x1xf32, #tpu.memory_space<vmem>>, vector<8x1xf32>
      %cst_23 = arith.constant 0.0357142873 : f32
      %27 = vector.broadcast %cst_23 : f32 to vector<8x1xf32>
      %28 = arith.mulf %26, %27 : vector<8x1xf32>
      %c0_24 = arith.constant 0 : index
      %c0_25 = arith.constant 0 : index
      %29 = vector.load %arg9[%c0_24, %c0_25] : memref<8x1xf32, #tpu.memory_space<vmem>>, vector<8x1xf32>
      %cst_26 = arith.constant 0.0357142873 : f32
      %30 = vector.broadcast %cst_26 : f32 to vector<8x1xf32>
      %31 = arith.mulf %29, %30 : vector<8x1xf32>
      %32 = arith.mulf %28, %28 : vector<8x1xf32>
      %33 = arith.subf %31, %32 : vector<8x1xf32>
      %c0_27 = arith.constant 0 : index
      %c0_28 = arith.constant 0 : index
      %34 = vector.load %arg5[%c0_27, %c0_28] : memref<8x1xf32, #tpu.memory_space<vmem>>, vector<8x1xf32>
      %cst_29 = arith.constant 9.99999974E-6 : f32
      %35 = vector.broadcast %cst_29 : f32 to vector<8x1xf32>
      %36 = arith.addf %33, %35 : vector<8x1xf32>
      %37 = math.rsqrt %36 : vector<8x1xf32>
      %38 = arith.mulf %34, %37 : vector<8x1xf32>
      %c0_30 = arith.constant 0 : index
      %c0_31 = arith.constant 0 : index
      %39 = vector.load %arg6[%c0_30, %c0_31] : memref<8x1xf32, #tpu.memory_space<vmem>>, vector<8x1xf32>
      %40 = arith.mulf %28, %38 : vector<8x1xf32>
      %41 = arith.subf %39, %40 : vector<8x1xf32>
      %42 = vector.broadcast %38 : vector<8x1xf32> to vector<8x14xf32>
      %43 = arith.mulf %25, %42 : vector<8x14xf32>
      %44 = vector.broadcast %41 : vector<8x1xf32> to vector<8x14xf32>
      %45 = arith.addf %43, %44 : vector<8x14xf32>
      %cst_32 = arith.constant 0.000000e+00 : f32
      %46 = vector.broadcast %cst_32 : f32 to vector<8x14xf32>
      %47 = arith.maximumf %45, %46 : vector<8x14xf32>
      %c0_33 = arith.constant 0 : index
      %c0_34 = arith.constant 0 : index
      %c0_35 = arith.constant 0 : index
      %48 = vector.load %arg7[%c0_33, %c0_34, %c0_35] : memref<1x8x14xf32, #tpu.memory_space<vmem>>, vector<1x8x14xf32>
      %49 = vector.shape_cast %48 : vector<1x8x14xf32> to vector<8x14xf32>
      %50 = vector.shape_cast %47 : vector<8x14xf32> to vector<1x8x14xf32>
      tpu.vector_store %arg7[%c0_33, %c0_34, %c0_35], %50 {strides = array<i32>} : memref<1x8x14xf32, #tpu.memory_space<vmem>>, vector<1x8x14xf32>,
    } else {
    }
    return
  }
  func.func @transform_0(%arg0: i32, %arg1: i32) -> (i32, i32, i32) {
    %c0_i32 = arith.constant 0 : i32
    %c0_i32_0 = arith.constant 0 : i32
    %c0_i32_1 = arith.constant 0 : i32
    return %arg1, %c0_i32, %c0_i32_0 : i32, i32, i32
  }
  func.func @transform_1(%arg0: i32, %arg1: i32) -> (i32, i32, i32) {
    %c0_i32 = arith.constant 0 : i32
    %c0_i32_0 = arith.constant 0 : i32
    %c0_i32_1 = arith.constant 0 : i32
    %c0_i32_2 = arith.constant 0 : i32
    return %c0_i32, %c0_i32_0, %c0_i32_1 : i32, i32, i32
  }
  func.func @transform_2(%arg0: i32, %arg1: i32) -> (i32, i32) {
    %c0_i32 = arith.constant 0 : i32
    %c0_i32_0 = arith.constant 0 : i32
    %c0_i32_1 = arith.constant 0 : i32
    return %c0_i32, %c0_i32_0 : i32, i32
  }
  func.func @transform_3(%arg0: i32, %arg1: i32) -> (i32, i32) {
    %c0_i32 = arith.constant 0 : i32
    %c0_i32_0 = arith.constant 0 : i32
    %c0_i32_1 = arith.constant 0 : i32
    return %c0_i32, %c0_i32_0 : i32, i32
  }
  func.func @transform_4(%arg0: i32, %arg1: i32) -> (i32, i32) {
    %c0_i32 = arith.constant 0 : i32
    %c0_i32_0 = arith.constant 0 : i32
    %c0_i32_1 = arith.constant 0 : i32
    return %c0_i32, %c0_i32_0 : i32, i32
  }
  func.func @transform_5(%arg0: i32, %arg1: i32) -> (i32, i32, i32) {
    %0 = arith.muli %arg1, %arg0 : i32
    %c0_i32 = arith.constant 0 : i32
    %c0_i32_0 = arith.constant 0 : i32
    %c0_i32_1 = arith.constant 0 : i32
    return %0, %c0_i32, %c0_i32_0 : i32, i32, i32
  }
}

</mosaic_0001>

<llo_original>
// kernel: basic_block_forward.1
$region0: #{basic_block_forward.1}
  #allocation0 [shape = 'u32[]', space=smem, size = 0x4, offset = 0x4, fixed_abs, tag = 'smem constant byte address 0x4 - core index']
  #allocation1 [shape = 'u32[144,128]{1,0:T(1,128)}', space=vmem, size = 0x12000, scoped, tag = 'internal scratch']
  #allocation2 [shape = 'f32[8,1]{1,0:T(8,128)}', space=vmem, size = 0x1000, scoped, tag = 'scratch operand']
  #allocation3 [shape = 'f32[8,1]{1,0:T(8,128)}', space=vmem, size = 0x1000, scoped, tag = 'scratch operand']
  %s0 = inlined_call_operand.vmem [shape: f32[2,4,16], index: 0, kind: input, shape index: {}]
  %s1 = inlined_call_operand.vmem [shape: f32[3,8,4], index: 1, kind: input, shape index: {}]
  %s2 = inlined_call_operand.vmem [shape: f32[8,1], index: 2, kind: input, shape index: {}]
  %s3 = inlined_call_operand.vmem [shape: f32[8,1], index: 3, kind: input, shape index: {}]
  %s4 = inlined_call_operand.vmem [shape: f32[8,1], index: 4, kind: input, shape index: {}]
  %s5 = inlined_call_operand.hbm [shape: f32[2,8,14], index: 5, kind: output, shape index: {}]
  %s6 = sld [smem:[#allocation0]]
  $region65: #{basic_block_forward.1} parent=0
    _
  %s8 = ssub.s32 1, %s6
  %s9 = scalar_select 0, %s8, %s6
  $region1: #{basic_block_forward.1} parent=0
    #allocation4 [shape = 'u8[8192]{0}', space=vmem, size = 0x2000, scoped, tag = 'output window, operand 0']
    #allocation5 [shape = 's32[2]{0}', space=sflag, size = 0x8, scoped, tag = 'scoped memory for basic_block_forward.1']
    %10 = vsyncpa [#allocation5], 0
    %s11 = scalar_lea.sflag [#allocation5], 1
    %12 = vsyncpa %s11, 0
    loop: start=0, step=1, limit=6
    $region2: #{basic_block_forward.1} parent=1 // loop_pre_header
      _
    $region3: #{basic_block_forward.1} parent=1 // loop_header
      %s14 = sphi 0, %s18
      %p15 = scmp.ge.s32.totalorder %s14, 6
      %s21 = sphi 0, %s33
      %s22 = sphi 0, %s29
      %s23 = sphi 0, %s21
      %s24 = sphi 0, %s22
      %s25 = sphi 0, %s23
      %s26 = sphi 0, %s24
      %s36 = sphi 0, %s38
      %s39 = sphi 0, %s36
      %s40 = sphi 0, %s39
      %s56 = sphi 0, %s40
      %s60 = sphi 0, %s60
      %s62 = sphi 0, %s60
      %s63 = sphi 0, %s62
      %s77 = sphi 0, %s63
      %s81 = sphi 0, %s81
      %s83 = sphi 0, %s81
      %s84 = sphi 0, %s83
      %s98 = sphi 0, %s84
      %s102 = sphi 0, %s102
      %s104 = sphi 0, %s102
      %s105 = sphi 0, %s104
      %s119 = sphi 0, %s105
      %s123 = sphi 0, %s123
      %s125 = sphi 0, %s123
      %s126 = sphi 0, %s125
      %s140 = sphi 0, %s126
      %s148 = sphi 0, %s150
      %s151 = sphi 0, %s148
      %s152 = sphi 0, %s151
      %s168 = sphi 0, %s152
    $region4: #{basic_block_forward.1} parent=1 // loop_header_branch
      %17 = sbr.rel (%p15) target = $region8
    $region5: #{basic_block_forward.1} parent=1 // loop_body
      %s19 = ssub.s32 %s14, 1
      %s20 = ssub.s32 %s14, 2
      %s27 = sadd.s32 1, %s22
      %p28 = scmp.ge.s32.totalorder %s27, 2
      %s29 = scalar_select %p28, 0, %s27
      %s30 = sadd.s32 1, %s21
      %s31 = scalar_select %p28, %s30, %s21
      %p32 = scmp.ge.s32.totalorder %s31, 2
      %s33 = scalar_select %p32, 0, %s31
      %s34 = ssub.s32 %s22, %s29
      %p35 = scmp.eq.s32.totalorder %s34, 0
      %s37 = sadd.s32 %s36, 1
      %s38 = scalar_select %p35, %s36, %s37
      %p41 = pneg %p35
      %p42 = scmp.eq.s32.totalorder %s14, 3
      %p43 = por %p41, %p42
      %p44 = scmp.ne.s32.totalorder %s36, %s39
      %p45 = scmp.eq.s32.totalorder %s14, 0
      %p46 = por %p44, %p45
      %p47 = scmp.ne.s32.totalorder %s36, %s39
      %p48 = scmp.eq.s32.totalorder %s19, 3
      %p49 = por %p47, %p48
      %p50 = scmp.ne.s32.totalorder %s39, %s40
      %p51 = scmp.eq.s32.totalorder %s19, 0
      %p52 = por %p50, %p51
      %p53 = scmp.ne.s32.totalorder %s39, %s40
      %p54 = scmp.eq.s32.totalorder %s20, 3
      %p55 = por %p53, %p54
      %p57 = scmp.ne.s32.totalorder %s40, %s56
      %p58 = scmp.eq.s32.totalorder %s20, 0
      %p59 = por %p57, %p58
      %s61 = sadd.s32 %s60, 1
      %p64 = scmp.eq.s32.totalorder %s14, 3
      %p65 = scmp.ne.s32.totalorder %s60, %s62
      %p66 = scmp.eq.s32.totalorder %s14, 0
      %p67 = por %p65, %p66
      %p68 = scmp.ne.s32.totalorder %s60, %s62
      %p69 = scmp.eq.s32.totalorder %s19, 3
      %p70 = por %p68, %p69
      %p71 = scmp.ne.s32.totalorder %s62, %s63
      %p72 = scmp.eq.s32.totalorder %s19, 0
      %p73 = por %p71, %p72
      %p74 = scmp.ne.s32.totalorder %s62, %s63
      %p75 = scmp.eq.s32.totalorder %s20, 3
      %p76 = por %p74, %p75
      %p78 = scmp.ne.s32.totalorder %s63, %s77
      %p79 = scmp.eq.s32.totalorder %s20, 0
      %p80 = por %p78, %p79
      %s82 = sadd.s32 %s81, 1
      %p85 = scmp.eq.s32.totalorder %s14, 3
      %p86 = scmp.ne.s32.totalorder %s81, %s83
      %p87 = scmp.eq.s32.totalorder %s14, 0
      %p88 = por %p86, %p87
      %p89 = scmp.ne.s32.totalorder %s81, %s83
      %p90 = scmp.eq.s32.totalorder %s19, 3
      %p91 = por %p89, %p90
      %p92 = scmp.ne.s32.totalorder %s83, %s84
      %p93 = scmp.eq.s32.totalorder %s19, 0
      %p94 = por %p92, %p93
      %p95 = scmp.ne.s32.totalorder %s83, %s84
      %p96 = scmp.eq.s32.totalorder %s20, 3
      %p97 = por %p95, %p96
      %p99 = scmp.ne.s32.totalorder %s84, %s98
      %p100 = scmp.eq.s32.totalorder %s20, 0
      %p101 = por %p99, %p100
      %s103 = sadd.s32 %s102, 1
      %p106 = scmp.eq.s32.totalorder %s14, 3
      %p107 = scmp.ne.s32.totalorder %s102, %s104
      %p108 = scmp.eq.s32.totalorder %s14, 0
      %p109 = por %p107, %p108
      %p110 = scmp.ne.s32.totalorder %s102, %s104
      %p111 = scmp.eq.s32.totalorder %s19, 3
      %p112 = por %p110, %p111
      %p113 = scmp.ne.s32.totalorder %s104, %s105
      %p114 = scmp.eq.s32.totalorder %s19, 0
      %p115 = por %p113, %p114
      %p116 = scmp.ne.s32.totalorder %s104, %s105
      %p117 = scmp.eq.s32.totalorder %s20, 3
      %p118 = por %p116, %p117
      %p120 = scmp.ne.s32.totalorder %s105, %s119
      %p121 = scmp.eq.s32.totalorder %s20, 0
      %p122 = por %p120, %p121
      %s124 = sadd.s32 %s123, 1
      %p127 = scmp.eq.s32.totalorder %s14, 3
      %p128 = scmp.ne.s32.totalorder %s123, %s125
      %p129 = scmp.eq.s32.totalorder %s14, 0
      %p130 = por %p128, %p129
      %p131 = scmp.ne.s32.totalorder %s123, %s125
      %p132 = scmp.eq.s32.totalorder %s19, 3
      %p133 = por %p131, %p132
      %p134 = scmp.ne.s32.totalorder %s125, %s126
      %p135 = scmp.eq.s32.totalorder %s19, 0
      %p136 = por %p134, %p135
      %p137 = scmp.ne.s32.totalorder %s125, %s126
      %p138 = scmp.eq.s32.totalorder %s20, 3
      %p139 = por %p137, %p138
      %p141 = scmp.ne.s32.totalorder %s126, %s140
      %p142 = scmp.eq.s32.totalorder %s20, 0
      %p143 = por %p141, %p142
      %s144 = smul.u32 %s22, %s21
      %s145 = smul.u32 %s29, %s33
      %s146 = ssub.s32 %s144, %s145
      %p147 = scmp.eq.s32.totalorder %s146, 0
      %s149 = sadd.s32 %s148, 1
      %s150 = scalar_select %p147, %s148, %s149
      %p153 = pneg %p147
      %p154 = scmp.eq.s32.totalorder %s14, 3
      %p155 = por %p153, %p154
      %p156 = scmp.ne.s32.totalorder %s148, %s151
      %p157 = scmp.eq.s32.totalorder %s14, 0
      %p158 = por %p156, %p157
      %p159 = scmp.ne.s32.totalorder %s148, %s151
      %p160 = scmp.eq.s32.totalorder %s19, 3
      %p161 = por %p159, %p160
      %p162 = scmp.ne.s32.totalorder %s151, %s152
      %p163 = scmp.eq.s32.totalorder %s19, 0
      %p164 = por %p162, %p163
      %p165 = scmp.ne.s32.totalorder %s151, %s152
      %p166 = scmp.eq.s32.totalorder %s20, 3
      %p167 = por %p165, %p166
      %p169 = scmp.ne.s32.totalorder %s152, %s168
      %p170 = scmp.eq.s32.totalorder %s20, 0
      %p171 = por %p169, %p170
      %p172 = scmp.le.s32.totalorder 1, %s14
      %p173 = scmp.lt.s32.totalorder %s14, 5
      %p174 = pnand %p172, %p173
      %p175 = pneg %p174
      // Predicated region
      $region9: #{basic_block_forward.1} parent=5 // pred_check
        _
      $region10: #{basic_block_forward.1} parent=5 // pred_check_branch
        %177 = sbr.rel (%p174) target = $region12
      $region11: #{basic_block_forward.1} parent=5 // pred_region
        %s178 = ssub.s32 %s14, 1
        // Predicated region
        $region13: #{basic_block_forward.1} parent=11 // pred_check
          %p179 = pneg %p73
        $region14: #{basic_block_forward.1} parent=11 // pred_check_branch
          %181 = sbr.rel (%p179) target = $region16
        $region15: #{basic_block_forward.1} parent=11 // pred_region
          _
        $region16: #{basic_block_forward.1} parent=11 // pred_fallthru
          _
        // Predicated region
        $region17: #{basic_block_forward.1} parent=11 // pred_check
          %p182 = pneg %p94
        $region18: #{basic_block_forward.1} parent=11 // pred_check_branch
          %184 = sbr.rel (%p182) target = $region20
        $region19: #{basic_block_forward.1} parent=11 // pred_region
          _
        $region20: #{basic_block_forward.1} parent=11 // pred_fallthru
          _
        // Predicated region
        $region21: #{basic_block_forward.1} parent=11 // pred_check
          %p185 = pneg %p115
        $region22: #{basic_block_forward.1} parent=11 // pred_check_branch
          %187 = sbr.rel (%p185) target = $region24
        $region23: #{basic_block_forward.1} parent=11 // pred_region
          _
        $region24: #{basic_block_forward.1} parent=11 // pred_fallthru
          _
        // Predicated region
        $region25: #{basic_block_forward.1} parent=11 // pred_check
          %p188 = pneg %p136
        $region26: #{basic_block_forward.1} parent=11 // pred_check_branch
          %190 = sbr.rel (%p188) target = $region28
        $region27: #{basic_block_forward.1} parent=11 // pred_region
          _
        $region28: #{basic_block_forward.1} parent=11 // pred_fallthru
          _
      $region12: #{basic_block_forward.1} parent=5 // pred_fallthru
        _
      %p191 = scmp.lt.s32.totalorder %s14, 4
      // Predicated region
      $region29: #{basic_block_forward.1} parent=5 // pred_check
        %p192 = pneg %p191
      $region30: #{basic_block_forward.1} parent=5 // pred_check_branch
        %194 = sbr.rel (%p192) target = $region32
      $region31: #{basic_block_forward.1} parent=5 // pred_region
        // Predicated region
        $region33: #{basic_block_forward.1} parent=31 // pred_check
          %p195 = pneg %p46
        $region34: #{basic_block_forward.1} parent=31 // pred_check_branch
          %197 = sbr.rel (%p195) target = $region36
        $region35: #{basic_block_forward.1} parent=31 // pred_region
          %p198 = scmp.lt.s32.totalorder %s22, 1
          %s199 = scalar_select %p198, %s22, 1
          %s200 = smul.addr %s199, 4
          %s201 = scalar_lea.vmem %s0, %s200
        $region36: #{basic_block_forward.1} parent=31 // pred_fallthru
          _
      $region32: #{basic_block_forward.1} parent=5 // pred_fallthru
        _
      %p202 = scmp.le.s32.totalorder 1, %s14
      %p203 = scmp.lt.s32.totalorder %s14, 5
      %p204 = pnand %p202, %p203
      %p205 = pneg %p204
      // Predicated region
      $region37: #{basic_block_forward.1} parent=5 // pred_check
        _
      $region38: #{basic_block_forward.1} parent=5 // pred_check_branch
        %207 = sbr.rel (%p204) target = $region40
      $region39: #{basic_block_forward.1} parent=5 // pred_region
        %s208 = ssub.s32 %s14, 1
        %p209 = scmp.lt.s32.totalorder %s24, 1
        %s210 = scalar_select %p209, %s24, 1
        %s211 = smul.addr %s210, 4
        %s212 = scalar_lea.vmem %s0, %s211
        %p213 = pneg %p52
        %p214 = pneg %p49
        %p215 = pneg %p73
        %p216 = pneg %p70
        %p217 = pneg %p94
        %p218 = pneg %p91
        %p219 = pneg %p115
        %p220 = pneg %p112
        %p221 = pneg %p136
        %p222 = pneg %p133
        %p223 = pneg %p164
        %p224 = pneg %p161
        %s225 = sand.u32 %s151, 1
        %s226 = scalar_lea.sflag [#allocation5], %s225
        %s227 = sand.u32 %s151, 1
        %s228 = smul.addr %s227, 8
        %s229 = scalar_lea.vmem [#allocation4], %s228
        %p230 = scmp.lt.s32.totalorder %s24, 1
        %s231 = scalar_select %p230, %s24, 1
        %s232 = smul.addr %s231, 4
        %s233 = scalar_lea.vmem %s0, %s232
        %s234 = smul.u32 %s24, %s23
        %p235 = scmp.eq.s32.totalorder %s23, 0
        // Predicated region
        $region41: #{basic_block_forward.1} parent=39 // pred_check
          %p236 = pneg %p235
        $region42: #{basic_block_forward.1} parent=39 // pred_check_branch
          %238 = sbr.rel (%p236) target = $region44
        $region43: #{basic_block_forward.1} parent=39 // pred_region
          %p239 = scmp.eq.s32.totalorder %s24, 0
          // Predicated region
          $region45: #{basic_block_forward.1} parent=43 // pred_check
            %p240 = pneg %p239
          $region46: #{basic_block_forward.1} parent=43 // pred_check_branch
            %242 = sbr.rel (%p240) target = $region48
          $region47: #{basic_block_forward.1} parent=43 // pred_region
            %vm243 = vcmask 7168
            %244 = vst.msk [vmem:[#allocation2] sm:$0xff] %vm243, 0.0
            %245 = vst.msk [vmem:[#allocation3] sm:$0xff] %vm243, 0.0
          $region48: #{basic_block_forward.1} parent=43 // pred_fallthru
            _
          %v246 = vld [vmem:[%s1] sm:$0xff]
          %v247 = vld [vmem:[%s233] sm:$0xf]
          %s248 = scalar_lea.vmem %s1, 8
          %v249 = vld [vmem:[%s248] sm:$0xff]
          %251 = vrot.lane.b32.xlu0 %v247, 127
          %v252 = vpop.permute.xlu0 %251
          %vm253 = vcmask 31744
          %v255 = vsel %vm253, %v249, 0
          %vm257 = vcmask 1043456
          %v258 = vsel %vm257, %v252, 0
          %260 = vmatprep.subr.mxu0 0.0
          %261 = vmatpush1.msra.mxu0 0.0
          %262 = vmatprep.subr.mxu0 0.0
          %263 = vmatpush1.msra.mxu0 0.0
          %264 = vmatprep.subr.mxu0 0.0
          %265 = vmatpush1.msra.mxu0 0.0
          %266 = vmatprep.subr.mxu0 0.0
          %267 = vmatpush1.msra.mxu0 0.0
          %268 = vmatprep.subr.mxu0 0.0
          %269 = vmatpush1.msra.mxu0 0.0
          %270 = vmatprep.subr.mxu0 0.0
          %271 = vmatpush1.msra.mxu0 0.0
          %272 = vmatprep.subr.mxu0 0.0
          %273 = vmatpush1.msra.mxu0 0.0
          %274 = vmatprep.subr.mxu0 0.0
          %275 = vmatpush1.msra.mxu0 0.0
          %276 = vmatprep.subr.mxu0 0.0
          %277 = vmatpush1.msra.mxu0 0.0
          %278 = vmatprep.subr.mxu0 0.0
          %279 = vmatpush1.msra.mxu0 0.0
          %280 = vmatprep.subr.mxu0 0.0
          %281 = vmatpush1.msra.mxu0 0.0
          %282 = vmatprep.subr.mxu0 0.0
          %283 = vmatpush1.msra.mxu0 0.0
          %284 = vmatprep.subr.mxu0 0.0
          %285 = vmatpush1.msra.mxu0 0.0
          %286 = vmatprep.subr.mxu0 0.0
          %287 = vmatpush1.msra.mxu0 0.0
          %288 = vmatprep.subr.mxu0 0.0
          %289 = vmatpush1.msra.mxu0 0.0
          %290 = vmatprep.subr.mxu0 0.0
          %291 = vmatpush1.msra.mxu0 %v258
          %292 = vmatprep.subr.mxu0 0.0
          %293 = vmatpush2.msra.mxu0 0.0
          %294 = vmatprep.subr.mxu0 0.0
          %295 = vmatpush2.msra.mxu0 0.0
          %296 = vmatprep.subr.mxu0 0.0
          %297 = vmatpush2.msra.mxu0 0.0
          %298 = vmatprep.subr.mxu0 0.0
          %299 = vmatpush2.msra.mxu0 0.0
          %300 = vmatprep.subr.mxu0 0.0
          %301 = vmatpush2.msra.mxu0 0.0
          %302 = vmatprep.subr.mxu0 0.0
          %303 = vmatpush2.msra.mxu0 0.0
          %304 = vmatprep.subr.mxu0 0.0
          %305 = vmatpush2.msra.mxu0 0.0
          %306 = vmatprep.subr.mxu0 0.0
          %307 = vmatpush2.msra.mxu0 0.0
          %308 = vmatprep.subr.mxu0 0.0
          %309 = vmatpush2.msra.mxu0 0.0
          %310 = vmatprep.subr.mxu0 0.0
          %311 = vmatpush2.msra.mxu0 0.0
          %312 = vmatprep.subr.mxu0 0.0
          %313 = vmatpush2.msra.mxu0 0.0
          %314 = vmatprep.subr.mxu0 0.0
          %315 = vmatpush2.msra.mxu0 0.0
          %316 = vmatprep.subr.mxu0 0.0
          %317 = vmatpush2.msra.mxu0 0.0
          %318 = vmatprep.subr.mxu0 0.0
          %319 = vmatpush2.msra.mxu0 0.0
          %320 = vmatprep.subr.mxu0 0.0
          %321 = vmatpush2.msra.mxu0 0.0
          %322 = vmatprep.subr.mxu0 0.0
          %323 = vmatpush2.msra.mxu0 0.0
          %324 = vmatprep.mubr.f32.mxu0 0.0
          %325 = vmatmul.mubr.f32.gmra.mxu0 %v255
          %v326 = vpop.f32.mrf.mxu0
          %v327 = vadd.f32 0.0, %v326
          %v328 = vpop.f32.mrf.mxu0
          %329 = vdwg.mxu0
          %v331 = vsel %vm253, %v246, 0
          %v333 = vsel %vm257, %v247, 0
          %335 = vmatprep.subr.mxu0 0.0
          %336 = vmatpush1.msra.mxu0 0.0
          %337 = vmatprep.subr.mxu0 0.0
          %338 = vmatpush1.msra.mxu0 0.0
          %339 = vmatprep.subr.mxu0 0.0
          %340 = vmatpush1.msra.mxu0 0.0
          %341 = vmatprep.subr.mxu0 0.0
          %342 = vmatpush1.msra.mxu0 0.0
          %343 = vmatprep.subr.mxu0 0.0
          %344 = vmatpush1.msra.mxu0 0.0
          %345 = vmatprep.subr.mxu0 0.0
          %346 = vmatpush1.msra.mxu0 0.0
          %347 = vmatprep.subr.mxu0 0.0
          %348 = vmatpush1.msra.mxu0 0.0
          %349 = vmatprep.subr.mxu0 0.0
          %350 = vmatpush1.msra.mxu0 0.0
          %351 = vmatprep.subr.mxu0 0.0
          %352 = vmatpush1.msra.mxu0 0.0
          %353 = vmatprep.subr.mxu0 0.0
          %354 = vmatpush1.msra.mxu0 0.0
          %355 = vmatprep.subr.mxu0 0.0
          %356 = vmatpush1.msra.mxu0 0.0
          %357 = vmatprep.subr.mxu0 0.0
          %358 = vmatpush1.msra.mxu0 0.0
          %359 = vmatprep.subr.mxu0 0.0
          %360 = vmatpush1.msra.mxu0 0.0
          %361 = vmatprep.subr.mxu0 0.0
          %362 = vmatpush1.msra.mxu0 0.0
          %363 = vmatprep.subr.mxu0 0.0
          %364 = vmatpush1.msra.mxu0 0.0
          %365 = vmatprep.subr.mxu0 0.0
          %366 = vmatpush1.msra.mxu0 %v333
          %367 = vmatprep.subr.mxu0 0.0
          %368 = vmatpush2.msra.mxu0 0.0
          %369 = vmatprep.subr.mxu0 0.0
          %370 = vmatpush2.msra.mxu0 0.0
          %371 = vmatprep.subr.mxu0 0.0
          %372 = vmatpush2.msra.mxu0 0.0
          %373 = vmatprep.subr.mxu0 0.0
          %374 = vmatpush2.msra.mxu0 0.0
          %375 = vmatprep.subr.mxu0 0.0
          %376 = vmatpush2.msra.mxu0 0.0
          %377 = vmatprep.subr.mxu0 0.0
          %378 = vmatpush2.msra.mxu0 0.0
          %379 = vmatprep.subr.mxu0 0.0
          %380 = vmatpush2.msra.mxu0 0.0
          %381 = vmatprep.subr.mxu0 0.0
          %382 = vmatpush2.msra.mxu0 0.0
          %383 = vmatprep.subr.mxu0 0.0
          %384 = vmatpush2.msra.mxu0 0.0
          %385 = vmatprep.subr.mxu0 0.0
          %386 = vmatpush2.msra.mxu0 0.0
          %387 = vmatprep.subr.mxu0 0.0
          %388 = vmatpush2.msra.mxu0 0.0
          %389 = vmatprep.subr.mxu0 0.0
          %390 = vmatpush2.msra.mxu0 0.0
          %391 = vmatprep.subr.mxu0 0.0
          %392 = vmatpush2.msra.mxu0 0.0
          %393 = vmatprep.subr.mxu0 0.0
          %394 = vmatpush2.msra.mxu0 0.0
          %395 = vmatprep.subr.mxu0 0.0
          %396 = vmatpush2.msra.mxu0 0.0
          %397 = vmatprep.subr.mxu0 0.0
          %398 = vmatpush2.msra.mxu0 0.0
          %399 = vmatprep.mubr.f32.mxu0 0.0
          %400 = vmatmul.mubr.f32.gmra.mxu0 %v331
          %v401 = vpop.f32.mrf.mxu0
          %v402 = vadd.f32 %v327, %v401
          %v403 = vpop.f32.mrf.mxu0
          %404 = vdwg.mxu0
          %s405 = scalar_lea.vmem %s1, 16
          %v406 = vld [vmem:[%s405] sm:$0xff]
          %407 = vrot.lane.b32.xlu0 %v247, 126
          %v408 = vpop.permute.xlu0 %407
          %v410 = vsel %vm253, %v406, 0
          %v412 = vsel %vm257, %v408, 0
          %414 = vmatprep.subr.mxu0 0.0
          %415 = vmatpush1.msra.mxu0 0.0
          %416 = vmatprep.subr.mxu0 0.0
          %417 = vmatpush1.msra.mxu0 0.0
          %418 = vmatprep.subr.mxu0 0.0
          %419 = vmatpush1.msra.mxu0 0.0
          %420 = vmatprep.subr.mxu0 0.0
          %421 = vmatpush1.msra.mxu0 0.0
          %422 = vmatprep.subr.mxu0 0.0
          %423 = vmatpush1.msra.mxu0 0.0
          %424 = vmatprep.subr.mxu0 0.0
          %425 = vmatpush1.msra.mxu0 0.0
          %426 = vmatprep.subr.mxu0 0.0
          %427 = vmatpush1.msra.mxu0 0.0
          %428 = vmatprep.subr.mxu0 0.0
          %429 = vmatpush1.msra.mxu0 0.0
          %430 = vmatprep.subr.mxu0 0.0
          %431 = vmatpush1.msra.mxu0 0.0
          %432 = vmatprep.subr.mxu0 0.0
          %433 = vmatpush1.msra.mxu0 0.0
          %434 = vmatprep.subr.mxu0 0.0
          %435 = vmatpush1.msra.mxu0 0.0
          %436 = vmatprep.subr.mxu0 0.0
          %437 = vmatpush1.msra.mxu0 0.0
          %438 = vmatprep.subr.mxu0 0.0
          %439 = vmatpush1.msra.mxu0 0.0
          %440 = vmatprep.subr.mxu0 0.0
          %441 = vmatpush1.msra.mxu0 0.0
          %442 = vmatprep.subr.mxu0 0.0
          %443 = vmatpush1.msra.mxu0 0.0
          %444 = vmatprep.subr.mxu0 0.0
          %445 = vmatpush1.msra.mxu0 %v412
          %446 = vmatprep.subr.mxu0 0.0
          %447 = vmatpush2.msra.mxu0 0.0
          %448 = vmatprep.subr.mxu0 0.0
          %449 = vmatpush2.msra.mxu0 0.0
          %450 = vmatprep.subr.mxu0 0.0
          %451 = vmatpush2.msra.mxu0 0.0
          %452 = vmatprep.subr.mxu0 0.0
          %453 = vmatpush2.msra.mxu0 0.0
          %454 = vmatprep.subr.mxu0 0.0
          %455 = vmatpush2.msra.mxu0 0.0
          %456 = vmatprep.subr.mxu0 0.0
          %457 = vmatpush2.msra.mxu0 0.0
          %458 = vmatprep.subr.mxu0 0.0
          %459 = vmatpush2.msra.mxu0 0.0
          %460 = vmatprep.subr.mxu0 0.0
          %461 = vmatpush2.msra.mxu0 0.0
          %462 = vmatprep.subr.mxu0 0.0
          %463 = vmatpush2.msra.mxu0 0.0
          %464 = vmatprep.subr.mxu0 0.0
          %465 = vmatpush2.msra.mxu0 0.0
          %466 = vmatprep.subr.mxu0 0.0
          %467 = vmatpush2.msra.mxu0 0.0
          %468 = vmatprep.subr.mxu0 0.0
          %469 = vmatpush2.msra.mxu0 0.0
          %470 = vmatprep.subr.mxu0 0.0
          %471 = vmatpush2.msra.mxu0 0.0
          %472 = vmatprep.subr.mxu0 0.0
          %473 = vmatpush2.msra.mxu0 0.0
          %474 = vmatprep.subr.mxu0 0.0
          %475 = vmatpush2.msra.mxu0 0.0
          %476 = vmatprep.subr.mxu0 0.0
          %477 = vmatpush2.msra.mxu0 0.0
          %478 = vmatprep.mubr.f32.mxu0 0.0
          %479 = vmatmul.mubr.f32.gmra.mxu0 %v410
          %v480 = vpop.f32.mrf.mxu0
          %v481 = vadd.f32 0.0, %v480
          %v482 = vpop.f32.mrf.mxu0
          %483 = vdwg.mxu0
          %v484 = vadd.f32 %v402, %v481
          %v485 = vld [vmem:[%s2] sm:$0xff]
          %487 = vset.pattern.permute.xlu0 0
          %488 = vperm.xlu0 %487, %v485
          %v489 = vpop.permute.xlu0 %488
          %v491 = vadd.f32 %v484, %v489
          %v492 = vld [vmem:[#allocation2] sm:$0xff]
          %vm493 = vcmask 113664
          %v494 = vsel %vm493, %v491, 0.0
          %495 = vadd.xlane.f32.xlu0 %v494
          %v496 = vpop.xlane.xlu0 %495
          %v497 = vadd.f32 %v492, %v496
          %vm498 = vcmask 7168
          %499 = vst.msk [vmem:[#allocation2] sm:$0xff] %vm498, %v497
          %v500 = vld [vmem:[#allocation3] sm:$0xff]
          %v501 = vmul.f32 %v491, %v491
          %v502 = vsel %vm493, %v501, 0.0
          %503 = vadd.xlane.f32.xlu0 %v502
          %v504 = vpop.xlane.xlu0 %503
          %v505 = vadd.f32 %v500, %v504
          %506 = vst.msk [vmem:[#allocation3] sm:$0xff] %vm498, %v505
        $region44: #{basic_block_forward.1} parent=39 // pred_fallthru
          _
        %p507 = scmp.eq.s32.totalorder %s23, 1
        // Predicated region
        $region49: #{basic_block_forward.1} parent=39 // pred_check
          %p508 = pneg %p507
        $region50: #{basic_block_forward.1} parent=39 // pred_check_branch
          %510 = sbr.rel (%p508) target = $region52
        $region51: #{basic_block_forward.1} parent=39 // pred_region
          %v511 = vld [vmem:[%s1] sm:$0xff]
          %v512 = vld [vmem:[%s233] sm:$0xf]
          %s513 = scalar_lea.vmem %s1, 8
          %v514 = vld [vmem:[%s513] sm:$0xff]
          %516 = vrot.lane.b32.xlu0 %v512, 127
          %v517 = vpop.permute.xlu0 %516
          %vm518 = vcmask 31744
          %v520 = vsel %vm518, %v514, 0
          %vm522 = vcmask 1043456
          %v523 = vsel %vm522, %v517, 0
          %525 = vmatprep.subr.mxu0 0.0
          %526 = vmatpush1.msra.mxu0 0.0
          %527 = vmatprep.subr.mxu0 0.0
          %528 = vmatpush1.msra.mxu0 0.0
          %529 = vmatprep.subr.mxu0 0.0
          %530 = vmatpush1.msra.mxu0 0.0
          %531 = vmatprep.subr.mxu0 0.0
          %532 = vmatpush1.msra.mxu0 0.0
          %533 = vmatprep.subr.mxu0 0.0
          %534 = vmatpush1.msra.mxu0 0.0
          %535 = vmatprep.subr.mxu0 0.0
          %536 = vmatpush1.msra.mxu0 0.0
          %537 = vmatprep.subr.mxu0 0.0
          %538 = vmatpush1.msra.mxu0 0.0
          %539 = vmatprep.subr.mxu0 0.0
          %540 = vmatpush1.msra.mxu0 0.0
          %541 = vmatprep.subr.mxu0 0.0
          %542 = vmatpush1.msra.mxu0 0.0
          %543 = vmatprep.subr.mxu0 0.0
          %544 = vmatpush1.msra.mxu0 0.0
          %545 = vmatprep.subr.mxu0 0.0
          %546 = vmatpush1.msra.mxu0 0.0
          %547 = vmatprep.subr.mxu0 0.0
          %548 = vmatpush1.msra.mxu0 0.0
          %549 = vmatprep.subr.mxu0 0.0
          %550 = vmatpush1.msra.mxu0 0.0
          %551 = vmatprep.subr.mxu0 0.0
          %552 = vmatpush1.msra.mxu0 0.0
          %553 = vmatprep.subr.mxu0 0.0
          %554 = vmatpush1.msra.mxu0 0.0
          %555 = vmatprep.subr.mxu0 0.0
          %556 = vmatpush1.msra.mxu0 %v523
          %557 = vmatprep.subr.mxu0 0.0
          %558 = vmatpush2.msra.mxu0 0.0
          %559 = vmatprep.subr.mxu0 0.0
          %560 = vmatpush2.msra.mxu0 0.0
          %561 = vmatprep.subr.mxu0 0.0
          %562 = vmatpush2.msra.mxu0 0.0
          %563 = vmatprep.subr.mxu0 0.0
          %564 = vmatpush2.msra.mxu0 0.0
          %565 = vmatprep.subr.mxu0 0.0
          %566 = vmatpush2.msra.mxu0 0.0
          %567 = vmatprep.subr.mxu0 0.0
          %568 = vmatpush2.msra.mxu0 0.0
          %569 = vmatprep.subr.mxu0 0.0
          %570 = vmatpush2.msra.mxu0 0.0
          %571 = vmatprep.subr.mxu0 0.0
          %572 = vmatpush2.msra.mxu0 0.0
          %573 = vmatprep.subr.mxu0 0.0
          %574 = vmatpush2.msra.mxu0 0.0
          %575 = vmatprep.subr.mxu0 0.0
          %576 = vmatpush2.msra.mxu0 0.0
          %577 = vmatprep.subr.mxu0 0.0
          %578 = vmatpush2.msra.mxu0 0.0
          %579 = vmatprep.subr.mxu0 0.0
          %580 = vmatpush2.msra.mxu0 0.0
          %581 = vmatprep.subr.mxu0 0.0
          %582 = vmatpush2.msra.mxu0 0.0
          %583 = vmatprep.subr.mxu0 0.0
          %584 = vmatpush2.msra.mxu0 0.0
          %585 = vmatprep.subr.mxu0 0.0
          %586 = vmatpush2.msra.mxu0 0.0
          %587 = vmatprep.subr.mxu0 0.0
          %588 = vmatpush2.msra.mxu0 0.0
          %589 = vmatprep.mubr.f32.mxu0 0.0
          %590 = vmatmul.mubr.f32.gmra.mxu0 %v520
          %v591 = vpop.f32.mrf.mxu0
          %v592 = vadd.f32 0.0, %v591
          %v593 = vpop.f32.mrf.mxu0
          %594 = vdwg.mxu0
          %v596 = vsel %vm518, %v511, 0
          %v598 = vsel %vm522, %v512, 0
          %600 = vmatprep.subr.mxu0 0.0
          %601 = vmatpush1.msra.mxu0 0.0
          %602 = vmatprep.subr.mxu0 0.0
          %603 = vmatpush1.msra.mxu0 0.0
          %604 = vmatprep.subr.mxu0 0.0
          %605 = vmatpush1.msra.mxu0 0.0
          %606 = vmatprep.subr.mxu0 0.0
          %607 = vmatpush1.msra.mxu0 0.0
          %608 = vmatprep.subr.mxu0 0.0
          %609 = vmatpush1.msra.mxu0 0.0
          %610 = vmatprep.subr.mxu0 0.0
          %611 = vmatpush1.msra.mxu0 0.0
          %612 = vmatprep.subr.mxu0 0.0
          %613 = vmatpush1.msra.mxu0 0.0
          %614 = vmatprep.subr.mxu0 0.0
          %615 = vmatpush1.msra.mxu0 0.0
          %616 = vmatprep.subr.mxu0 0.0
          %617 = vmatpush1.msra.mxu0 0.0
          %618 = vmatprep.subr.mxu0 0.0
          %619 = vmatpush1.msra.mxu0 0.0
          %620 = vmatprep.subr.mxu0 0.0
          %621 = vmatpush1.msra.mxu0 0.0
          %622 = vmatprep.subr.mxu0 0.0
          %623 = vmatpush1.msra.mxu0 0.0
          %624 = vmatprep.subr.mxu0 0.0
          %625 = vmatpush1.msra.mxu0 0.0
          %626 = vmatprep.subr.mxu0 0.0
          %627 = vmatpush1.msra.mxu0 0.0
          %628 = vmatprep.subr.mxu0 0.0
          %629 = vmatpush1.msra.mxu0 0.0
          %630 = vmatprep.subr.mxu0 0.0
          %631 = vmatpush1.msra.mxu0 %v598
          %632 = vmatprep.subr.mxu0 0.0
          %633 = vmatpush2.msra.mxu0 0.0
          %634 = vmatprep.subr.mxu0 0.0
          %635 = vmatpush2.msra.mxu0 0.0
          %636 = vmatprep.subr.mxu0 0.0
          %637 = vmatpush2.msra.mxu0 0.0
          %638 = vmatprep.subr.mxu0 0.0
          %639 = vmatpush2.msra.mxu0 0.0
          %640 = vmatprep.subr.mxu0 0.0
          %641 = vmatpush2.msra.mxu0 0.0
          %642 = vmatprep.subr.mxu0 0.0
          %643 = vmatpush2.msra.mxu0 0.0
          %644 = vmatprep.subr.mxu0 0.0
          %645 = vmatpush2.msra.mxu0 0.0
          %646 = vmatprep.subr.mxu0 0.0
          %647 = vmatpush2.msra.mxu0 0.0
          %648 = vmatprep.subr.mxu0 0.0
          %649 = vmatpush2.msra.mxu0 0.0
          %650 = vmatprep.subr.mxu0 0.0
          %651 = vmatpush2.msra.mxu0 0.0
          %652 = vmatprep.subr.mxu0 0.0
          %653 = vmatpush2.msra.mxu0 0.0
          %654 = vmatprep.subr.mxu0 0.0
          %655 = vmatpush2.msra.mxu0 0.0
          %656 = vmatprep.subr.mxu0 0.0
          %657 = vmatpush2.msra.mxu0 0.0
          %658 = vmatprep.subr.mxu0 0.0
          %659 = vmatpush2.msra.mxu0 0.0
          %660 = vmatprep.subr.mxu0 0.0
          %661 = vmatpush2.msra.mxu0 0.0
          %662 = vmatprep.subr.mxu0 0.0
          %663 = vmatpush2.msra.mxu0 0.0
          %664 = vmatprep.mubr.f32.mxu0 0.0
          %665 = vmatmul.mubr.f32.gmra.mxu0 %v596
          %v666 = vpop.f32.mrf.mxu0
          %v667 = vadd.f32 %v592, %v666
          %v668 = vpop.f32.mrf.mxu0
          %669 = vdwg.mxu0
          %s670 = scalar_lea.vmem %s1, 16
          %v671 = vld [vmem:[%s670] sm:$0xff]
          %672 = vrot.lane.b32.xlu0 %v512, 126
          %v673 = vpop.permute.xlu0 %672
          %v675 = vsel %vm518, %v671, 0
          %v677 = vsel %vm522, %v673, 0
          %679 = vmatprep.subr.mxu0 0.0
          %680 = vmatpush1.msra.mxu0 0.0
          %681 = vmatprep.subr.mxu0 0.0
          %682 = vmatpush1.msra.mxu0 0.0
          %683 = vmatprep.subr.mxu0 0.0
          %684 = vmatpush1.msra.mxu0 0.0
          %685 = vmatprep.subr.mxu0 0.0
          %686 = vmatpush1.msra.mxu0 0.0
          %687 = vmatprep.subr.mxu0 0.0
          %688 = vmatpush1.msra.mxu0 0.0
          %689 = vmatprep.subr.mxu0 0.0
          %690 = vmatpush1.msra.mxu0 0.0
          %691 = vmatprep.subr.mxu0 0.0
          %692 = vmatpush1.msra.mxu0 0.0
          %693 = vmatprep.subr.mxu0 0.0
          %694 = vmatpush1.msra.mxu0 0.0
          %695 = vmatprep.subr.mxu0 0.0
          %696 = vmatpush1.msra.mxu0 0.0
          %697 = vmatprep.subr.mxu0 0.0
          %698 = vmatpush1.msra.mxu0 0.0
          %699 = vmatprep.subr.mxu0 0.0
          %700 = vmatpush1.msra.mxu0 0.0
          %701 = vmatprep.subr.mxu0 0.0
          %702 = vmatpush1.msra.mxu0 0.0
          %703 = vmatprep.subr.mxu0 0.0
          %704 = vmatpush1.msra.mxu0 0.0
          %705 = vmatprep.subr.mxu0 0.0
          %706 = vmatpush1.msra.mxu0 0.0
          %707 = vmatprep.subr.mxu0 0.0
          %708 = vmatpush1.msra.mxu0 0.0
          %709 = vmatprep.subr.mxu0 0.0
          %710 = vmatpush1.msra.mxu0 %v677
          %711 = vmatprep.subr.mxu0 0.0
          %712 = vmatpush2.msra.mxu0 0.0
          %713 = vmatprep.subr.mxu0 0.0
          %714 = vmatpush2.msra.mxu0 0.0
          %715 = vmatprep.subr.mxu0 0.0
          %716 = vmatpush2.msra.mxu0 0.0
          %717 = vmatprep.subr.mxu0 0.0
          %718 = vmatpush2.msra.mxu0 0.0
          %719 = vmatprep.subr.mxu0 0.0
          %720 = vmatpush2.msra.mxu0 0.0
          %721 = vmatprep.subr.mxu0 0.0
          %722 = vmatpush2.msra.mxu0 0.0
          %723 = vmatprep.subr.mxu0 0.0
          %724 = vmatpush2.msra.mxu0 0.0
          %725 = vmatprep.subr.mxu0 0.0
          %726 = vmatpush2.msra.mxu0 0.0
          %727 = vmatprep.subr.mxu0 0.0
          %728 = vmatpush2.msra.mxu0 0.0
          %729 = vmatprep.subr.mxu0 0.0
          %730 = vmatpush2.msra.mxu0 0.0
          %731 = vmatprep.subr.mxu0 0.0
          %732 = vmatpush2.msra.mxu0 0.0
          %733 = vmatprep.subr.mxu0 0.0
          %734 = vmatpush2.msra.mxu0 0.0
          %735 = vmatprep.subr.mxu0 0.0
          %736 = vmatpush2.msra.mxu0 0.0
          %737 = vmatprep.subr.mxu0 0.0
          %738 = vmatpush2.msra.mxu0 0.0
          %739 = vmatprep.subr.mxu0 0.0
          %740 = vmatpush2.msra.mxu0 0.0
          %741 = vmatprep.subr.mxu0 0.0
          %742 = vmatpush2.msra.mxu0 0.0
          %743 = vmatprep.mubr.f32.mxu0 0.0
          %744 = vmatmul.mubr.f32.gmra.mxu0 %v675
          %v745 = vpop.f32.mrf.mxu0
          %v746 = vadd.f32 0.0, %v745
          %v747 = vpop.f32.mrf.mxu0
          %748 = vdwg.mxu0
          %v749 = vadd.f32 %v667, %v746
          %v750 = vld [vmem:[%s2] sm:$0xff]
          %752 = vset.pattern.permute.xlu0 0
          %753 = vperm.xlu0 %752, %v750
          %v754 = vpop.permute.xlu0 %753
          %v756 = vadd.f32 %v749, %v754
          %v757 = vld [vmem:[#allocation2] sm:$0xff]
          %v758 = vmul.f32 %v757, 0.035714287
          %v759 = vld [vmem:[#allocation3] sm:$0xff]
          %v760 = vmul.f32 %v759, 0.035714287
          %v761 = vmul.f32 %v758, %v758
          %v762 = vsub.f32 %v760, %v761
          %v763 = vld [vmem:[%s3] sm:$0xff]
          %v764 = vadd.f32 %v762, 1e-05
          %v765 = vrsqrt.pop %v764
          %v766 = vmul.f32 %v763, %v765
          %v767 = vld [vmem:[%s4] sm:$0xff]
          %v768 = vmul.f32 %v758, %v766
          %v769 = vsub.f32 %v767, %v768
          %771 = vset.pattern.permute.xlu0 0
          %772 = vperm.xlu0 %771, %v766
          %v773 = vpop.permute.xlu0 %772
          %v775 = vmul.f32 %v756, %v773
          %777 = vset.pattern.permute.xlu0 0
          %778 = vperm.xlu0 %777, %v769
          %v779 = vpop.permute.xlu0 %778
          %v781 = vadd.f32 %v775, %v779
          %v782 = vmax.f32 %v781, 0.0
          %vm783 = vcmask 113664
          %784 = vst.msk [vmem:[%s229] sm:$0xff] %vm783, %v782
        $region52: #{basic_block_forward.1} parent=39 // pred_fallthru
          _
        %s785 = sand.u32 %s151, 1
        %s786 = scalar_lea.sflag [#allocation5], %s785
        %s787 = sand.u32 %s151, 1
        %s788 = smul.addr %s787, 8
        %s789 = scalar_lea.vmem [#allocation4], %s788
        // Predicated region
        $region53: #{basic_block_forward.1} parent=39 // pred_check
          %p790 = pneg %p161
        $region54: #{basic_block_forward.1} parent=39 // pred_check_branch
          %792 = sbr.rel (%p790) target = $region56
        $region55: #{basic_block_forward.1} parent=39 // pred_region
          %s793 = smul.u32 %s24, %s23
          %s795 = ssub.s32 128, 128
          %796 = vsyncadd %s786, %s795
          %s797 = smul.addr %s793, 128
          %s798 = scalar_lea.hbm %s5, %s797
          %s800 = sshll.u32 %s789, 4
          %s801 = int_to_ptr.vmem [resolvable:$true] %s800
          %803 = dma.vmem_to_hbm [thread:$0]  %s801, 128, %s798, %s786
        $region56: #{basic_block_forward.1} parent=39 // pred_fallthru
          _
      $region40: #{basic_block_forward.1} parent=5 // pred_fallthru
        _
      %p804 = scmp.le.s32.totalorder 2, %s14
      // Predicated region
      $region57: #{basic_block_forward.1} parent=5 // pred_check
        %p805 = pneg %p804
      $region58: #{basic_block_forward.1} parent=5 // pred_check_branch
        %807 = sbr.rel (%p805) target = $region60
      $region59: #{basic_block_forward.1} parent=5 // pred_region
        %s808 = ssub.s32 %s14, 2
        // Predicated region
        $region61: #{basic_block_forward.1} parent=59 // pred_check
          %p809 = pneg %p167
        $region62: #{basic_block_forward.1} parent=59 // pred_check_branch
          %811 = sbr.rel (%p809) target = $region64
        $region63: #{basic_block_forward.1} parent=59 // pred_region
          %s812 = sand.u32 %s152, 1
          %s813 = scalar_lea.sflag [#allocation5], %s812
          %s814 = sand.u32 %s152, 1
          %s815 = smul.addr %s814, 8
          %s816 = scalar_lea.vmem [#allocation4], %s815
          %817 = dma.done %s813, 128
        $region64: #{basic_block_forward.1} parent=59 // pred_fallthru
          _
      $region60: #{basic_block_forward.1} parent=5 // pred_fallthru
        _
    $region6: #{basic_block_forward.1} parent=1 // loop_footer
      %s18 = sadd.s32 1, %s14
    $region7: #{basic_block_forward.1} parent=1 // loop_footer_branch
      %13 = sbr.rel target = $region3
    $region8: #{basic_block_forward.1} parent=1 // loop_exit
      _
    %818 = vsyncpa [#allocation5], 1
    %s819 = scalar_lea.sflag [#allocation5], 1
    %820 = vsyncpa %s819, 1

</llo_original>
